<compile_context>
chip_gen: v6e
topology: v6e:2x2x1
jax: 0.10.0
libtpu: 0.0.40
codegen_flags: <defaults>
</compile_context>

<pallas_src>
import functools

import jax
import jax.numpy as jnp
from jax.experimental import pallas as pl
from jax.experimental.pallas import tpu as pltpu

LANES = 128
SUBLANES = 8
# (2048, 128) f32 block = 1 MiB per input per pipeline buffer.
MAX_TILE_ROWS = 2048


def _bpr_kernel(n_ref, pos_ref, neg_ref, out_ref, *, gamma, tile_rows):
    i = pl.program_id(0)
    tile_elems = tile_rows * LANES

    pos = pos_ref[...].astype(jnp.float32)
    neg = neg_ref[...].astype(jnp.float32)
    # TODO(synk): if this ever becomes EUP-bound, trade the exact sigmoid for
    # pl.reciprocal(1 + exp(-d), approx=True); flagged as a numerics change.
    val = -jnp.log(gamma + jax.nn.sigmoid(pos - neg))

    def _partial(x):
        # (tile_rows, 128) -> (8, 128): grouping sublanes is layout-free, the
        # axis-0 sum is whole-vreg VPU adds (no XLU cross-lane reduce).
        return jnp.sum(x.reshape(tile_rows // SUBLANES, SUBLANES, LANES), axis=0)

    n_valid = n_ref[0]
    tile_end = (i + 1) * tile_elems  # int32; fine for N < 2**31 elements

    @pl.when(tile_end <= n_valid)  # full tile: no masking needed
    def _():
        out_ref[0] = _partial(val)

    @pl.when(tile_end > n_valid)  # ragged tail tile: mask out padding
    def _():
        row = jax.lax.broadcasted_iota(jnp.int32, (tile_rows, LANES), 0)
        col = jax.lax.broadcasted_iota(jnp.int32, (tile_rows, LANES), 1)
        local_idx = row * LANES + col
        remaining = n_valid - i * tile_elems
        out_ref[0] = _partial(jnp.where(local_idx < remaining, val, 0.0))


def bpr_loss(pos_score, neg_score, gamma=1e-10, *, max_tile_rows=MAX_TILE_ROWS):
    """BPR loss: -mean(log(gamma + sigmoid(pos - neg))). Returns f32 scalar."""
    pos_flat = jnp.ravel(pos_score)
    neg_flat = jnp.ravel(neg_score)
    n = pos_flat.size

    # Largest row tile (multiple of 8 sublanes) the input needs, capped at
    # max_tile_rows; pad (only if necessary) so the grid divides evenly.
    max_tile_rows = max(SUBLANES, (int(max_tile_rows) // SUBLANES) * SUBLANES)
    rows = pl.cdiv(n, LANES)
    rows_aligned = max(SUBLANES, pl.cdiv(rows, SUBLANES) * SUBLANES)
    tile_rows = min(max_tile_rows, rows_aligned)
    num_tiles = pl.cdiv(rows_aligned, tile_rows)
    rows_padded = num_tiles * tile_rows
    n_pad = rows_padded * LANES

    # TODO(synk): for very large unaligned N this pad costs one extra HBM pass
    # per input; a zero-copy variant would take the raw arrays via
    # memory_space=pl.ANY and DMA aligned chunks manually, masking the tail.
    if n_pad != n:
        pos_flat = jnp.pad(pos_flat, (0, n_pad - n))
        neg_flat = jnp.pad(neg_flat, (0, n_pad - n))
    pos_p = pos_flat.reshape(rows_padded, LANES)
    neg_p = neg_flat.reshape(rows_padded, LANES)

    n_arr = jnp.array([n], dtype=jnp.int32)
    kernel = functools.partial(_bpr_kernel, gamma=float(gamma), tile_rows=tile_rows)

    partials = pl.pallas_call(
        kernel,
        out_shape=jax.ShapeDtypeStruct((num_tiles, SUBLANES, LANES), jnp.float32),
        grid_spec=pltpu.PrefetchScalarGridSpec(
            num_scalar_prefetch=1,
            grid=(num_tiles,),
            in_specs=[
                pl.BlockSpec((tile_rows, LANES), lambda i, n_ref: (i, 0)),
                pl.BlockSpec((tile_rows, LANES), lambda i, n_ref: (i, 0)),
            ],
            out_specs=pl.BlockSpec(
                (1, SUBLANES, LANES), lambda i, n_ref: (i, 0, 0)
            ),
        ),
        compiler_params=pltpu.CompilerParams(
            dimension_semantics=("parallel",)
        ),
    )(n_arr, pos_p, neg_p)

    # Tiny final reduce + mean: plain-JAX glue.
    return (jnp.sum(partials) / jnp.float32(n)).astype(jnp.float32)


if __name__ == "__main__":
    key = jax.random.PRNGKey(0)

    def ref_loss(p, q, gamma=1e-10):
        p = p.astype(jnp.float32)
        q = q.astype(jnp.float32)
        return -jnp.mean(jnp.log(gamma + jax.nn.sigmoid(p - q)))

    # 1) SR-GNN style per-example scores; batch not a multiple of 8*128 so the
    #    ragged-tail mask path is exercised (single tile).
    k1, k2 = jax.random.split(key)
    batch = 200
    pos = jax.random.normal(k1, (batch,), dtype=jnp.float32)
    neg = jax.random.normal(k2, (batch,), dtype=jnp.float32)
    loss = bpr_loss(pos, neg)
    jax.block_until_ready(loss)
    assert jnp.allclose(loss, ref_loss(pos, neg), rtol=1e-5, atol=1e-6), (
        loss, ref_loss(pos, neg))

    # 2) Multi-tile grid (full-tile path + ragged-tail path + parallel
    #    partials) at a small size by shrinking the tile cap.
    k3, k4 = jax.random.split(k2)
    n2 = 3000
    pos2 = jax.random.normal(k3, (n2,), dtype=jnp.float32)
    neg2 = jax.random.normal(k4, (n2,), dtype=jnp.float32)
    loss2 = bpr_loss(pos2, neg2, max_tile_rows=16)
    jax.block_until_ready(loss2)
    assert jnp.allclose(loss2, ref_loss(pos2, neg2), rtol=1e-4, atol=1e-5), (
        loss2, ref_loss(pos2, neg2))

    # 3) bf16 inputs (HBM bytes halved; math stays f32 inside the kernel).
    pos3 = pos2.astype(jnp.bfloat16)
    neg3 = neg2.astype(jnp.bfloat16)
    loss3 = bpr_loss(pos3, neg3, max_tile_rows=16)
    jax.block_until_ready(loss3)
    assert jnp.allclose(loss3, ref_loss(pos3, neg3), rtol=1e-3, atol=1e-4), (
        loss3, ref_loss(pos3, neg3))

    print("KERNEL_OK")
</pallas_src>

<mosaic_0001>
module attributes {stable_mosaic.version = 11 : i64} {
  func.func @_bpr_kernel(%arg0: i32, %arg1: memref<1xi32, #tpu.memory_space<smem>>, %arg2: memref<8x128xf32, #tpu.memory_space<vmem>>, %arg3: memref<8x128xf32, #tpu.memory_space<vmem>>, %arg4: memref<1x8x128xf32, #tpu.memory_space<vmem>>) attributes {dimension_semantics = [#tpu.dimension_semantics<parallel>], iteration_bounds = array<i64: 1>, scalar_prefetch = 1 : i64, scratch_operands = 0 : i64, tpu.core_type = #tpu.core_type<tc>, window_params = [{transform_indices = @transform_0, window_bounds = array<i64: 8, 128>}, {transform_indices = @transform_1, window_bounds = array<i64: 8, 128>}, {transform_indices = @transform_2, window_bounds = array<i64: 1, 8, 128>}]} {
    %c0 = arith.constant 0 : index
    %c0_0 = arith.constant 0 : index
    %0 = vector.load %arg2[%c0, %c0_0] : memref<8x128xf32, #tpu.memory_space<vmem>>, vector<8x128xf32>
    %c0_1 = arith.constant 0 : index
    %c0_2 = arith.constant 0 : index
    %1 = vector.load %arg3[%c0_1, %c0_2] : memref<8x128xf32, #tpu.memory_space<vmem>>, vector<8x128xf32>
    %2 = arith.subf %0, %1 : vector<8x128xf32>
    %3 = arith.negf %2 : vector<8x128xf32>
    %4 = math.exp %3 : vector<8x128xf32>
    %cst = arith.constant 1.000000e+00 : f32
    %5 = vector.broadcast %cst : f32 to vector<8x128xf32>
    %6 = arith.addf %5, %4 : vector<8x128xf32>
    %7 = arith.divf %5, %6 : vector<8x128xf32>
    %cst_3 = arith.constant 1.000000e-10 : f32
    %8 = vector.broadcast %cst_3 : f32 to vector<8x128xf32>
    %9 = arith.addf %8, %7 : vector<8x128xf32>
    %10 = math.log %9 : vector<8x128xf32>
    %cst_4 = arith.constant 0.000000e+00 : f32
    %11 = vector.broadcast %cst_4 : f32 to vector<8x128xf32>
    %12 = arith.subf %11, %10 : vector<8x128xf32>
    %c0_5 = arith.constant 0 : index
    %13 = memref.load %arg1[%c0_5] : memref<1xi32, #tpu.memory_space<smem>>
    %c1_i32 = arith.constant 1 : i32
    %14 = arith.addi %arg0, %c1_i32 : i32
    %c1024_i32 = arith.constant 1024 : i32
    %15 = arith.muli %14, %c1024_i32 : i32
    %16 = arith.cmpi sle, %15, %13 : i32
    %17 = arith.extui %16 : i1 to i32
    %c0_i32 = arith.constant 0 : i32
    %18 = arith.cmpi ne, %17, %c0_i32 : i32
    scf.if %18 {
      %22 = vector.shape_cast %12 : vector<8x128xf32> to vector<1x8x128xf32>
      %cst_7 = arith.constant dense<0.000000e+00> : vector<8x128xf32>
      %23 = vector.multi_reduction <add>, %22, %cst_7 [0] : vector<1x8x128xf32> to vector<8x128xf32>
      %c0_8 = arith.constant 0 : index
      %c0_9 = arith.constant 0 : index
      %c0_10 = arith.constant 0 : index
      %24 = vector.load %arg4[%c0_8, %c0_9, %c0_10] : memref<1x8x128xf32, #tpu.memory_space<vmem>>, vector<1x8x128xf32>
      %25 = vector.shape_cast %24 : vector<1x8x128xf32> to vector<8x128xf32>
      %26 = vector.shape_cast %23 : vector<8x128xf32> to vector<1x8x128xf32>
      tpu.vector_store %arg4[%c0_8, %c0_9, %c0_10], %26 {strides = array<i32>} : memref<1x8x128xf32, #tpu.memory_space<vmem>>, vector<1x8x128xf32>,
    } else {
    }
    %19 = arith.cmpi sgt, %15, %13 : i32
    %20 = arith.extui %19 : i1 to i32
    %c0_i32_6 = arith.constant 0 : i32
    %21 = arith.cmpi ne, %20, %c0_i32_6 : i32
    scf.if %21 {
      %22 = tpu.iota {dimensions = array<i32: 0>} : vector<8x128xi32>
      %23 = tpu.iota {dimensions = array<i32: 1>} : vector<8x128xi32>
      %c128_i32 = arith.constant 128 : i32
      %24 = vector.broadcast %c128_i32 : i32 to vector<8x128xi32>
      %25 = arith.muli %22, %24 : vector<8x128xi32>
      %26 = arith.addi %25, %23 : vector<8x128xi32>
      %c1024_i32_7 = arith.constant 1024 : i32
      %27 = arith.muli %arg0, %c1024_i32_7 : i32
      %28 = arith.subi %13, %27 : i32
      %29 = vector.broadcast %28 : i32 to vector<8x128xi32>
      %30 = arith.cmpi slt, %26, %29 : vector<8x128xi32>
      %cst_8 = arith.constant 0.000000e+00 : f32
      %31 = vector.broadcast %cst_8 : f32 to vector<8x128xf32>
      %32 = arith.select %30, %12, %31 : vector<8x128xi1>, vector<8x128xf32>
      %33 = vector.shape_cast %32 : vector<8x128xf32> to vector<1x8x128xf32>
      %cst_9 = arith.constant dense<0.000000e+00> : vector<8x128xf32>
      %34 = vector.multi_reduction <add>, %33, %cst_9 [0] : vector<1x8x128xf32> to vector<8x128xf32>
      %c0_10 = arith.constant 0 : index
      %c0_11 = arith.constant 0 : index
      %c0_12 = arith.constant 0 : index
      %35 = vector.load %arg4[%c0_10, %c0_11, %c0_12] : memref<1x8x128xf32, #tpu.memory_space<vmem>>, vector<1x8x128xf32>
      %36 = vector.shape_cast %35 : vector<1x8x128xf32> to vector<8x128xf32>
      %37 = vector.shape_cast %34 : vector<8x128xf32> to vector<1x8x128xf32>
      tpu.vector_store %arg4[%c0_10, %c0_11, %c0_12], %37 {strides = array<i32>} : memref<1x8x128xf32, #tpu.memory_space<vmem>>, vector<1x8x128xf32>,
    } else {
    }
    return
  }
  func.func @transform_0(%arg0: i32, %arg1: memref<1xi32, #tpu.memory_space<smem>>) -> (i32, i32) {
    %c0_i32 = arith.constant 0 : i32
    %c0_i32_0 = arith.constant 0 : i32
    return %arg0, %c0_i32 : i32, i32
  }
  func.func @transform_1(%arg0: i32, %arg1: memref<1xi32, #tpu.memory_space<smem>>) -> (i32, i32) {
    %c0_i32 = arith.constant 0 : i32
    %c0_i32_0 = arith.constant 0 : i32
    return %arg0, %c0_i32 : i32, i32
  }
  func.func @transform_2(%arg0: i32, %arg1: memref<1xi32, #tpu.memory_space<smem>>) -> (i32, i32, i32) {
    %c0_i32 = arith.constant 0 : i32
    %c0_i32_0 = arith.constant 0 : i32
    %c0_i32_1 = arith.constant 0 : i32
    return %arg0, %c0_i32, %c0_i32_0 : i32, i32, i32
  }
}

</mosaic_0001>

<llo_original>
// kernel: tpu_custom_call.1
$region0: #{tpu_custom_call.1}
  #allocation0 [shape = 'u32[]', space=smem, size = 0x4, offset = 0x4, fixed_abs, tag = 'smem constant byte address 0x4 - core index']
  #allocation1 [shape = 'u32[144,128]{1,0:T(1,128)}', space=vmem, size = 0x12000, scoped, tag = 'internal scratch']
  #allocation2 [shape = 's32[1]{0}', space=sflag, size = 0x4, scoped, tag = 'scoped memory for tpu_custom_call.1']
  #allocation3 [shape = 's32[1]{0:T(128)S(6)}', space=smem, size = 0x200, scoped, tag = 'prefetched SMEM operand 0']
  %s0 = inlined_call_operand.<no memory space> [shape: s32[1], index: 0, kind: input, shape index: {}]
  %s1 = inlined_call_operand.hbm [shape: f32[8,128], index: 1, kind: input, shape index: {}]
  %s2 = inlined_call_operand.hbm [shape: f32[8,128], index: 2, kind: input, shape index: {}]
  %s3 = inlined_call_operand.hbm [shape: f32[1,8,128], index: 3, kind: output, shape index: {}]
  %s4 = sld [smem:[#allocation0]]
  $region34: #{tpu_custom_call.1} parent=0
    _
  %s6 = ssub.s32 1, %s4
  %s7 = scalar_select 0, %s6, %s4
  %8 = sst [smem:[#allocation3]] %s0
  $region1: #{tpu_custom_call.1} parent=0
    #allocation4 [shape = 'u8[4096]{0}', space=vmem, size = 0x1000, scoped, tag = 'input window, operand 1, single buffered']
    #allocation5 [shape = 's32[1]{0}', space=sflag, size = 0x4, scoped, tag = 'scoped memory for tpu_custom_call.1']
    #allocation6 [shape = 's32[1]{0}', space=sflag, size = 0x4, scoped, tag = 'scoped memory for tpu_custom_call.1']
    #allocation7 [shape = 'u8[4096]{0}', space=vmem, size = 0x1000, scoped, tag = 'input window, operand 2, single buffered']
    #allocation8 [shape = 's32[1]{0}', space=sflag, size = 0x4, scoped, tag = 'scoped memory for tpu_custom_call.1']
    #allocation9 [shape = 'u8[4096]{0}', space=vmem, size = 0x1000, scoped, tag = 'output window, operand 0, single buffered']
    %9 = vsyncpa [#allocation5], 0
    %10 = vsyncpa [#allocation8], 0
    %11 = vsyncpa [#allocation6], 0
    // Predicated region
    $region2: #{tpu_custom_call.1} parent=1 // pred_check
      _
    $region3: #{tpu_custom_call.1} parent=1 // pred_check_branch
      %13 = sbr.rel (0) target = $region5
    $region4: #{tpu_custom_call.1} parent=1 // pred_region
      %s15 = ssub.s32 128, 128
      %16 = vsyncadd [#allocation5], %s15
      %s18 = sshll.u32 [#allocation4], 4
      %s19 = int_to_ptr.vmem [resolvable:$true] %s18
      %21 = dma.hbm_to_vmem [thread:$0]  %s1, 128, %s19, [#allocation5]
    $region5: #{tpu_custom_call.1} parent=1 // pred_fallthru
      _
    // Predicated region
    $region6: #{tpu_custom_call.1} parent=1 // pred_check
      _
    $region7: #{tpu_custom_call.1} parent=1 // pred_check_branch
      %23 = sbr.rel (0) target = $region9
    $region8: #{tpu_custom_call.1} parent=1 // pred_region
      %s25 = ssub.s32 128, 128
      %26 = vsyncadd [#allocation8], %s25
      %s28 = sshll.u32 [#allocation7], 4
      %s29 = int_to_ptr.vmem [resolvable:$true] %s28
      %31 = dma.hbm_to_vmem [thread:$0]  %s2, 128, %s29, [#allocation8]
    $region9: #{tpu_custom_call.1} parent=1 // pred_fallthru
      _
    // Predicated region
    $region10: #{tpu_custom_call.1} parent=1 // pred_check
      _
    $region11: #{tpu_custom_call.1} parent=1 // pred_check_branch
      %33 = sbr.rel (0) target = $region13
    $region12: #{tpu_custom_call.1} parent=1 // pred_region
      %34 = dma.done [#allocation5], 128
    $region13: #{tpu_custom_call.1} parent=1 // pred_fallthru
      _
    // Predicated region
    $region14: #{tpu_custom_call.1} parent=1 // pred_check
      _
    $region15: #{tpu_custom_call.1} parent=1 // pred_check_branch
      %36 = sbr.rel (0) target = $region17
    $region16: #{tpu_custom_call.1} parent=1 // pred_region
      %37 = dma.done [#allocation8], 128
    $region17: #{tpu_custom_call.1} parent=1 // pred_fallthru
      _
    %v38 = vld [vmem:[#allocation4] sm:$0xff]
    %v39 = vld [vmem:[#allocation7] sm:$0xff]
    %v40 = vsub.f32 %v38, %v39
    %v41 = vxor.u32 %v40, 2147483648
    %v42 = vmul.f32 %v41, 1.442695
    %v43 = vpow.pop %v42
    %v44 = vadd.f32 %v43, 1.0
    %v45 = vrcp.pop %v44
    %v46 = vmul.f32 1.0, %v45
    %v47 = vadd.f32 %v46, 1e-10
    %v48 = vlog2.pop %v47
    %v49 = vmul.f32 %v48, 0.6931472
    %v50 = vsub.f32 0.0, %v49
    %s51 = sld [smem:[#allocation3]]
    %s52 = sadd.s32 0, 1
    %s53 = smul.u32 %s52, 1024
    %p54 = scmp.le.s32.totalorder %s53, %s51
    // Predicated region
    $region18: #{tpu_custom_call.1} parent=1 // pred_check
      %p55 = pneg %p54
    $region19: #{tpu_custom_call.1} parent=1 // pred_check_branch
      %57 = sbr.rel (%p55) target = $region21
    $region20: #{tpu_custom_call.1} parent=1 // pred_region
      %v58 = vadd.f32 %v50, 0.0
      %59 = vst [vmem:[#allocation9] sm:$0xff] %v58
    $region21: #{tpu_custom_call.1} parent=1 // pred_fallthru
      _
    %p60 = scmp.gt.s32.totalorder %s53, %s51
    // Predicated region
    $region22: #{tpu_custom_call.1} parent=1 // pred_check
      %p61 = pneg %p60
    $region23: #{tpu_custom_call.1} parent=1 // pred_check_branch
      %63 = sbr.rel (%p61) target = $region25
    $region24: #{tpu_custom_call.1} parent=1 // pred_region
      %v64 = vlaneseq
      %v65 = vshrl.u32 %v64, 7
      %v66 = vlaneseq
      %v67 = vand.u32 %v66, 127
      %v68 = vmul.u32 %v65, 128
      %v69 = vadd.s32 %v68, %v67
      %s70 = smul.u32 0, 1024
      %s71 = ssub.s32 %s51, %s70
      %v72 = vstv %s71
      %vm73 = vcmp.lt.s32.totalorder %v69, %v72
      %v74 = vsel %vm73, %v50, 0.0
      %v75 = vadd.f32 %v74, 0.0
      %76 = vst [vmem:[#allocation9] sm:$0xff] %v75
    $region25: #{tpu_custom_call.1} parent=1 // pred_fallthru
      _
    // Predicated region
    $region26: #{tpu_custom_call.1} parent=1 // pred_check
      _
    $region27: #{tpu_custom_call.1} parent=1 // pred_check_branch
      %78 = sbr.rel (0) target = $region29
    $region28: #{tpu_custom_call.1} parent=1 // pred_region
      %s80 = ssub.s32 128, 128
      %81 = vsyncadd [#allocation6], %s80
      %s83 = sshll.u32 [#allocation9], 4
      %s84 = int_to_ptr.vmem [resolvable:$true] %s83
      %86 = dma.vmem_to_hbm [thread:$0]  %s84, 128, %s3, [#allocation6]
    $region29: #{tpu_custom_call.1} parent=1 // pred_fallthru
      _
    // Predicated region
    $region30: #{tpu_custom_call.1} parent=1 // pred_check
      _
    $region31: #{tpu_custom_call.1} parent=1 // pred_check_branch
      %88 = sbr.rel (0) target = $region33
    $region32: #{tpu_custom_call.1} parent=1 // pred_region
      %89 = dma.done [#allocation6], 128
    $region33: #{tpu_custom_call.1} parent=1 // pred_fallthru
      _
    %90 = vsyncpa [#allocation5], 1
    %91 = vsyncpa [#allocation8], 1
    %92 = vsyncpa [#allocation6], 1

</llo_original>
